<compile_context>
chip_gen: v7x
topology: tpu7x:2x2x1
jax: 0.10.0
libtpu: 0.0.40
codegen_flags: <defaults>
</compile_context>

<pallas_src>
import functools

import jax
import jax.numpy as jnp
from jax.experimental import pallas as pl
from jax.experimental.pallas import tpu as pltpu

BN_EPS = 1e-5
_LANE = 128
_MAX_TK = 4096                 # weight block <= TK*TN*2B = 2 MiB (v5e-safe)
_X_BLOCK_BYTES = 1 << 20       # bf16 activation-tile budget per buffer


# ----------------------------------------------------------------------------
# Pallas kernel: batched tiled GEMM + per-output-channel scale/bias + act.
# Grid = (G, M-blocks, N-blocks, K-blocks).  f32 accumulation; bf16 output is
# written once, at the last K step, lane-dense.
# ----------------------------------------------------------------------------
def _epilogue(acc, s, b, act):
    y = acc * s + b
    if act == "relu":
        y = jnp.maximum(y, 0.0)
    elif act == "leaky":
        y = jnp.where(y >= 0.0, y, 0.2 * y)
    elif act == "tanh":
        y = jnp.tanh(y)
    return y


def _gemm_bn_act_kernel(x_ref, w_ref, s_ref, b_ref, o_ref, *scratch, act, nk):
    part = jnp.dot(x_ref[...], w_ref[...], preferred_element_type=jnp.float32)

    if nk == 1:   # static: single K step -> no scratch round trip at all
        o_ref[...] = _epilogue(part, s_ref[...], b_ref[...], act).astype(o_ref.dtype)
        return

    acc_ref = scratch[0]
    k = pl.program_id(3)

    @pl.when(k == 0)
    def _():
        acc_ref[...] = part

    @pl.when(k > 0)
    def _():
        acc_ref[...] = acc_ref[...] + part

    @pl.when(k == nk - 1)
    def _():
        o_ref[...] = _epilogue(acc_ref[...], s_ref[...], b_ref[...],
                               act).astype(o_ref.dtype)


# ----------------------------------------------------------------------------
# Tiling helpers
# ----------------------------------------------------------------------------
def _round_up(v, m):
    return ((v + m - 1) // m) * m


def _pad_dim(a, axis, target):
    cur = a.shape[axis]
    if cur == target:
        return a
    cfg = [(0, 0)] * a.ndim
    cfg[axis] = (0, target - cur)
    return jnp.pad(a, cfg)


def _kn_tiles(K, N):
    """(TK, Kp, TN, Np) from the contraction/output-channel sizes.

    Depends only on the weight shape, so it is applied once at pack time;
    fused_gemm re-derives it from the padded weight (idempotent on padded
    sizes).  Np is always a multiple of 128 -> lane-dense stores.
    """
    if K <= _MAX_TK:
        Kp = _round_up(K, _LANE)
        TK = Kp
    else:
        TK = _MAX_TK
        Kp = _round_up(K, TK)
    Np = _round_up(N, _LANE)
    if Np > 256 and Np % 256 == 0:
        TN = 256          # keep >=2 N blocks for N=512 (v7x dual-TC sharding)
    else:
        TN = Np if Np <= 512 else 128
    return TK, Kp, TN, Np


def _m_tile(M, TK):
    """TM up to 4096 for small-K layers; activation block <= ~1 MiB bf16."""
    Mp = _round_up(M, 8)
    cap = max(512, _X_BLOCK_BYTES // (TK * 2))
    TM = min(Mp, cap)
    Mp = _round_up(Mp, TM)
    return TM, Mp


# ----------------------------------------------------------------------------
# Fused GEMM wrapper
# ----------------------------------------------------------------------------
def fused_gemm(x, w, scale, bias, act):
    """y[g] = act((x[g] @ w[g]) * scale + bias) -> (G, Mp, Np) bf16.

    x: (G, M, K) any float dtype (cast to bf16).  w: (G, Kp, Np) pre-padded
    bf16 (packed once).  scale/bias: (1, Np) f32, zero in padded columns.
    """
    G, M, _ = x.shape
    Kp, Np = w.shape[1], w.shape[2]
    TK, kp2, TN, np2 = _kn_tiles(Kp, Np)
    assert (kp2, np2) == (Kp, Np), "weight not packed with _kn_tiles"
    TM, Mp = _m_tile(M, TK)

    x = _pad_dim(_pad_dim(x.astype(jnp.bfloat16), 1, Mp), 2, Kp)

    nk = Kp // TK
    grid = (G, Mp // TM, Np // TN, nk)
    scratch = [pltpu.VMEM((TM, TN), jnp.float32)] if nk > 1 else []

    out = pl.pallas_call(
        functools.partial(_gemm_bn_act_kernel, act=act, nk=nk),
        out_shape=jax.ShapeDtypeStruct((G, Mp, Np), jnp.bfloat16),
        grid_spec=pltpu.PrefetchScalarGridSpec(
            num_scalar_prefetch=0,
            grid=grid,
            in_specs=[
                pl.BlockSpec((None, TM, TK), lambda g, i, j, k: (g, i, k)),
                pl.BlockSpec((None, TK, TN), lambda g, i, j, k: (g, k, j)),
                pl.BlockSpec((1, TN), lambda g, i, j, k: (0, j)),
                pl.BlockSpec((1, TN), lambda g, i, j, k: (0, j)),
            ],
            out_specs=pl.BlockSpec((None, TM, TN), lambda g, i, j, k: (g, i, j)),
            scratch_shapes=scratch,
        ),
        compiler_params=pltpu.CompilerParams(
            dimension_semantics=("parallel", "parallel", "parallel", "arbitrary"),
            vmem_limit_bytes=32 * 1024 * 1024),
    )(x, w, scale, bias)
    return out   # padded; callers slice M / N


# ----------------------------------------------------------------------------
# Glue (plain JAX): patch extraction + deconv phase decomposition.
# ----------------------------------------------------------------------------
def _im2col(x, k, stride):
    """x: (N,H,W,C) already padded -> (N*Ho*Wo, k*k*C); column order (ky,kx,c)."""
    n, H, W, C = x.shape
    Ho = (H - k) // stride + 1
    Wo = (W - k) // stride + 1
    cols = []
    for dy in range(k):
        for dx in range(k):
            cols.append(jax.lax.slice(
                x, (0, dy, dx, 0),
                (n, dy + (Ho - 1) * stride + 1, dx + (Wo - 1) * stride + 1, C),
                (1, stride, stride, 1)))
    patches = jnp.concatenate(cols, axis=-1)
    return patches.reshape(n * Ho * Wo, k * k * C), (n, Ho, Wo)


def _deconv_phase_patches(x):
    """4-phase patches for ConvTranspose2d(k=4,s=2,p=1).

    x: (N,H,W,C) -> (4, N*H*W, 4*C); phase order (ry,rx) row-major, column
    order (dy,dx,c).
    """
    n, H, W, C = x.shape
    xp = jnp.pad(x, ((0, 0), (1, 1), (1, 1), (0, 0)))

    def sl(y0, x0):
        return jax.lax.slice(xp, (0, y0, x0, 0), (n, y0 + H, x0 + W, C))

    phases = []
    for ry in range(2):
        for rx in range(2):
            cols = [sl(ry + dy, rx + dx) for dy in range(2) for dx in range(2)]
            phases.append(jnp.concatenate(cols, axis=-1).reshape(n * H * W, 4 * C))
    return jnp.stack(phases, axis=0)


def _deconv_phase_weights(w):
    """w: (Cin,Cout,4,4) -> (4, 4*Cin, Cout) per-phase 2x2 GEMM weights.

    out[2p+ry, 2q+rx] = sum_{dy,dx} xpad[p+ry+dy, q+rx+dx] * w[taps[ry][dy], taps[rx][dx]]
    """
    cin, cout = w.shape[0], w.shape[1]
    taps = ((3, 1), (2, 0))
    mats = []
    for ry in range(2):
        for rx in range(2):
            wp = w[:, :, jnp.array(taps[ry]), :][:, :, :, jnp.array(taps[rx])]
            wp = jnp.transpose(wp, (2, 3, 0, 1)).reshape(4 * cin, cout)
            mats.append(wp)
    return jnp.stack(mats, axis=0)


def _fold_bn(conv_bias, bn):
    """Eval-mode BatchNorm folded into per-channel (scale, bias)."""
    if bn is None:
        return jnp.ones_like(conv_bias), conv_bias
    gamma, beta, mean, var = bn
    scale = gamma / jnp.sqrt(var + BN_EPS)
    bias = (conv_bias - mean) * scale + beta
    return scale, bias


def conv_block(x, layer, cout, act):
    """Conv2d(k=4,s=2,p=1) + BN + act.  x: NHWC bf16; layer packed."""
    wmat, scale, bias = layer                      # wmat: (1, Kp, Np) bf16
    xp = jnp.pad(x, ((0, 0), (1, 1), (1, 1), (0, 0)))
    patches, (n, Ho, Wo) = _im2col(xp, 4, 2)
    y = fused_gemm(patches[None], wmat, scale, bias, act)
    return y[0, :n * Ho * Wo, :cout].reshape(n, Ho, Wo, cout)


def deconv_block(x, layer, cout, act):
    """ConvTranspose2d(k=4,s=2,p=1) + (BN) + act via 4-phase decomposition."""
    wmats, scale, bias = layer                     # (4, Kp, Np) bf16
    n, H, W, _ = x.shape
    patches = _deconv_phase_patches(x)             # (4, n*H*W, 4*Cin)
    y = fused_gemm(patches, wmats, scale, bias, act)
    y = y[:, :n * H * W, :cout].reshape(2, 2, n, H, W, cout)
    return jnp.transpose(y, (2, 3, 0, 4, 1, 5)).reshape(n, 2 * H, 2 * W, cout)


# ----------------------------------------------------------------------------
# Parameters: raw (PyTorch-layout) init + one-time GEMM packing.
# ----------------------------------------------------------------------------
def _bn_params(c):
    return (jnp.ones((c,), jnp.float32), jnp.zeros((c,), jnp.float32),
            jnp.zeros((c,), jnp.float32), jnp.ones((c,), jnp.float32))


def init_params(key):
    keys = iter(jax.random.split(key, 64))

    def conv(cin, cout):
        fan_out = cout * 16
        w = jax.random.normal(next(keys), (cout, cin, 4, 4), jnp.float32) \
            * jnp.sqrt(2.0 / fan_out)             # kaiming_normal_ fan_out
        b = jnp.zeros((cout,), jnp.float32)       # zeroed in init_weight
        return (w, b, _bn_params(cout))

    def deconv(cin, cout, bn=True):
        fan_in = cin * 16
        w = jax.random.normal(next(keys), (cin, cout, 4, 4), jnp.float32) \
            * jnp.sqrt(2.0 / fan_in)              # kaiming_normal_ fan_in
        b = jax.random.normal(next(keys), (cout,), jnp.float32) * 0.01
        return (w, b, _bn_params(cout) if bn else None)

    return {
        "conv1": conv(3, 8), "conv2": conv(8, 64), "conv3": conv(64, 128),
        "conv4": conv(128, 256), "conv5": conv(256, 512),
        "conv6": conv(512, 512), "conv7": conv(512, 512),
        "deconv1": deconv(512, 512), "deconv2": deconv(1024, 512),
        "deconv3": deconv(1024, 256), "deconv4": deconv(512, 128),
        "deconv5": deconv(256, 64), "deconv6": deconv(128, 8),
        "last": deconv(16, 3, bn=False),
    }


def _pack_scale_bias(b, bn, Np):
    scale, bias = _fold_bn(b, bn)
    scale = _pad_dim(scale.reshape(1, -1).astype(jnp.float32), 1, Np)
    bias = _pad_dim(bias.reshape(1, -1).astype(jnp.float32), 1, Np)
    return scale, bias


def _pack_conv(w, b, bn):
    cout, cin = w.shape[0], w.shape[1]
    K = 16 * cin
    _, Kp, _, Np = _kn_tiles(K, cout)
    wmat = jnp.transpose(w, (2, 3, 1, 0)).reshape(K, cout)   # rows (ky,kx,ci)
    wmat = _pad_dim(_pad_dim(wmat, 0, Kp), 1, Np).astype(jnp.bfloat16)
    scale, bias = _pack_scale_bias(b, bn, Np)
    return wmat[None], scale, bias


def _pack_deconv(w, b, bn):
    cin, cout = w.shape[0], w.shape[1]
    K = 4 * cin
    _, Kp, _, Np = _kn_tiles(K, cout)
    wmats = _deconv_phase_weights(w)                          # (4, 4*Cin, Cout)
    wmats = _pad_dim(_pad_dim(wmats, 1, Kp), 2, Np).astype(jnp.bfloat16)
    scale, bias = _pack_scale_bias(b, bn, Np)
    return wmats, scale, bias


_CONV_LAYERS = ("conv1", "conv2", "conv3", "conv4", "conv5", "conv6", "conv7")
_DECONV_LAYERS = ("deconv1", "deconv2", "deconv3", "deconv4", "deconv5",
                  "deconv6", "last")


def pack_params(params):
    """One-time prep: bf16 GEMM weights (K/N pre-padded) + folded BN scale/bias."""
    packed = {}
    for name in _CONV_LAYERS:
        packed[name] = _pack_conv(*params[name])
    for name in _DECONV_LAYERS:
        packed[name] = _pack_deconv(*params[name])
    return packed


# ----------------------------------------------------------------------------
# Forward pass (mirrors FullyConvNetwork.forward, eval mode)
# ----------------------------------------------------------------------------
def forward(x_nchw, packed):
    x = jnp.transpose(x_nchw, (0, 2, 3, 1)).astype(jnp.bfloat16)   # NCHW->NHWC
    d1 = conv_block(x, packed["conv1"], 8, "relu")
    d2 = conv_block(d1, packed["conv2"], 64, "leaky")
    d3 = conv_block(d2, packed["conv3"], 128, "leaky")
    d4 = conv_block(d3, packed["conv4"], 256, "leaky")
    d5 = conv_block(d4, packed["conv5"], 512, "leaky")
    d6 = conv_block(d5, packed["conv6"], 512, "leaky")
    d7 = conv_block(d6, packed["conv7"], 512, "leaky")

    u1 = deconv_block(d7, packed["deconv1"], 512, "relu")
    # Dropout2d(0.5) in deconv2/deconv3 is identity in eval mode.
    u2 = deconv_block(jnp.concatenate([u1, d6], -1), packed["deconv2"], 512, "relu")
    u3 = deconv_block(jnp.concatenate([u2, d5], -1), packed["deconv3"], 256, "relu")
    u4 = deconv_block(jnp.concatenate([u3, d4], -1), packed["deconv4"], 128, "relu")
    u5 = deconv_block(jnp.concatenate([u4, d3], -1), packed["deconv5"], 64, "relu")
    u6 = deconv_block(jnp.concatenate([u5, d2], -1), packed["deconv6"], 8, "relu")
    out = deconv_block(jnp.concatenate([u6, d1], -1), packed["last"], 3, "tanh")
    return jnp.transpose(out, (0, 3, 1, 2)).astype(jnp.float32)    # NHWC->NCHW


# ----------------------------------------------------------------------------
# Numerical self-check of the conv / 4-phase-deconv lowering vs lax convs.
# ----------------------------------------------------------------------------
def _apply_act(y, act):
    if act == "relu":
        return jnp.maximum(y, 0.0)
    if act == "leaky":
        return jnp.where(y >= 0.0, y, 0.2 * y)
    if act == "tanh":
        return jnp.tanh(y)
    return y


def _ref_conv_block(x, w, b, bn, act):
    wf = jnp.transpose(w, (2, 3, 1, 0))                        # HWIO
    y = jax.lax.conv_general_dilated(
        x, wf, window_strides=(2, 2), padding=((1, 1), (1, 1)),
        dimension_numbers=("NHWC", "HWIO", "NHWC"))
    scale, bias = _fold_bn(b, bn)
    return _apply_act(y * scale + bias, act)


def _ref_deconv_block(x, w, b, bn, act):
    wf = jnp.transpose(w[:, :, ::-1, ::-1], (2, 3, 0, 1))      # flipped, HWIO
    y = jax.lax.conv_general_dilated(
        x, wf, window_strides=(1, 1), padding=((2, 2), (2, 2)),
        lhs_dilation=(2, 2), dimension_numbers=("NHWC", "HWIO", "NHWC"))
    scale, bias = _fold_bn(b, bn)
    return _apply_act(y * scale + bias, act)


def _assert_close(name, got, ref):
    err = float(jnp.max(jnp.abs(got - ref)))
    tol = 2e-2 * (1.0 + float(jnp.max(jnp.abs(ref))))
    assert err < tol, f"{name}: max abs err {err} > tol {tol}"


def _self_check(key):
    kx, kw1, kw2, kb = jax.random.split(key, 4)
    x = jax.random.normal(kx, (1, 8, 8, 8), jnp.float32)
    xq = x.astype(jnp.bfloat16).astype(jnp.float32)
    b = jax.random.normal(kb, (16,), jnp.float32) * 0.1
    bn = _bn_params(16)

    # Conv2d(k=4,s=2,p=1) path
    w = jax.random.normal(kw1, (16, 8, 4, 4), jnp.float32) * 0.1
    wq = w.astype(jnp.bfloat16).astype(jnp.float32)
    got = conv_block(x.astype(jnp.bfloat16), _pack_conv(w, b, bn), 16,
                     "leaky").astype(jnp.float32)
    _assert_close("conv_block", got, _ref_conv_block(xq, wq, b, bn, "leaky"))

    # ConvTranspose2d(k=4,s=2,p=1) path (4-phase decomposition)
    wt = jax.random.normal(kw2, (8, 16, 4, 4), jnp.float32) * 0.1
    wtq = wt.astype(jnp.bfloat16).astype(jnp.float32)
    got = deconv_block(x.astype(jnp.bfloat16), _pack_deconv(wt, b, bn), 16,
                       "relu").astype(jnp.float32)
    _assert_close("deconv_block", got, _ref_deconv_block(xq, wtq, b, bn, "relu"))


# ----------------------------------------------------------------------------
if __name__ == "__main__":
    key = jax.random.PRNGKey(0)
    k_param, k_x, k_check = jax.random.split(key, 3)

    _self_check(k_check)     # validates the conv / 4-phase deconv GEMM math

    params = init_params(k_param)
    packed = jax.jit(pack_params)(params)         # one-time weight packing
    # Smallest spatial size the 7-level U-Net supports is 128 (down to 1x1).
    x = jax.random.normal(k_x, (2, 3, 128, 128), jnp.float32)

    y = jax.jit(forward)(x, packed)
    y = jax.block_until_ready(y)

    assert y.shape == (2, 3, 128, 128), y.shape
    assert bool(jnp.all(jnp.isfinite(y))), "non-finite output"
    assert bool(jnp.all(jnp.abs(y) <= 1.0 + 1e-6)), "tanh range violated"
    print("KERNEL_OK")
</pallas_src>

<mosaic_0001>
module attributes {stable_mosaic.version = 11 : i64} {
  func.func @_gemm_bn_act_kernel(%arg0: i32, %arg1: i32, %arg2: i32, %arg3: i32, %arg4: memref<1x16x128xbf16, #tpu.memory_space<vmem>>, %arg5: memref<1x128x128xbf16, #tpu.memory_space<vmem>>, %arg6: memref<1x128xf32, #tpu.memory_space<vmem>>, %arg7: memref<1x128xf32, #tpu.memory_space<vmem>>, %arg8: memref<1x16x128xbf16, #tpu.memory_space<vmem>>) attributes {dimension_semantics = [#tpu.dimension_semantics<parallel>, #tpu.dimension_semantics<parallel>, #tpu.dimension_semantics<parallel>, #tpu.dimension_semantics<arbitrary>], iteration_bounds = array<i64: 1, 1, 1, 1>, scalar_prefetch = 0 : i64, scratch_operands = 0 : i64, tpu.core_type = #tpu.core_type<tc>, window_params = [{transform_indices = @transform_0, window_bounds = array<i64: 1, 16, 128>}, {transform_indices = @transform_1, window_bounds = array<i64: 1, 128, 128>}, {transform_indices = @transform_2, window_bounds = array<i64: 1, 128>}, {transform_indices = @transform_3, window_bounds = array<i64: 1, 128>}, {transform_indices = @transform_4, window_bounds = array<i64: 1, 16, 128>}]} {
    %c0 = arith.constant 0 : index
    %c0_0 = arith.constant 0 : index
    %c0_1 = arith.constant 0 : index
    %0 = vector.load %arg4[%c0, %c0_0, %c0_1] : memref<1x16x128xbf16, #tpu.memory_space<vmem>>, vector<1x16x128xbf16>
    %1 = vector.shape_cast %0 : vector<1x16x128xbf16> to vector<16x128xbf16>
    %c0_2 = arith.constant 0 : index
    %c0_3 = arith.constant 0 : index
    %c0_4 = arith.constant 0 : index
    %2 = vector.load %arg5[%c0_2, %c0_3, %c0_4] : memref<1x128x128xbf16, #tpu.memory_space<vmem>>, vector<1x128x128xbf16>
    %3 = vector.shape_cast %2 : vector<1x128x128xbf16> to vector<128x128xbf16>
    %cst = arith.constant dense<0.000000e+00> : vector<16x128xf32>
    %4 = tpu.matmul %1, %3, %cst {dimension_numbers = #tpu.dot_dimension_numbers<[1], [0], [0], [1], [0, 0, 1, 1], [], []>} : vector<16x128xbf16>, vector<128x128xbf16>, vector<16x128xf32> -> vector<16x128xf32>
    %c0_5 = arith.constant 0 : index
    %c0_6 = arith.constant 0 : index
    %5 = vector.load %arg6[%c0_5, %c0_6] : memref<1x128xf32, #tpu.memory_space<vmem>>, vector<1x128xf32>
    %c0_7 = arith.constant 0 : index
    %c0_8 = arith.constant 0 : index
    %6 = vector.load %arg7[%c0_7, %c0_8] : memref<1x128xf32, #tpu.memory_space<vmem>>, vector<1x128xf32>
    %7 = vector.broadcast %5 : vector<1x128xf32> to vector<16x128xf32>
    %8 = arith.mulf %4, %7 : vector<16x128xf32>
    %9 = vector.broadcast %6 : vector<1x128xf32> to vector<16x128xf32>
    %10 = arith.addf %8, %9 : vector<16x128xf32>
    %cst_9 = arith.constant 0.000000e+00 : f32
    %11 = vector.broadcast %cst_9 : f32 to vector<16x128xf32>
    %12 = arith.cmpf oge, %10, %11 : vector<16x128xf32>
    %cst_10 = arith.constant 2.000000e-01 : f32
    %13 = vector.broadcast %cst_10 : f32 to vector<16x128xf32>
    %14 = arith.mulf %13, %10 : vector<16x128xf32>
    %15 = arith.select %12, %10, %14 : vector<16x128xi1>, vector<16x128xf32>
    %16 = arith.truncf %15 : vector<16x128xf32> to vector<16x128xbf16>
    %c0_11 = arith.constant 0 : index
    %c0_12 = arith.constant 0 : index
    %c0_13 = arith.constant 0 : index
    %17 = vector.load %arg8[%c0_11, %c0_12, %c0_13] : memref<1x16x128xbf16, #tpu.memory_space<vmem>>, vector<1x16x128xbf16>
    %18 = vector.shape_cast %17 : vector<1x16x128xbf16> to vector<16x128xbf16>
    %19 = vector.shape_cast %16 : vector<16x128xbf16> to vector<1x16x128xbf16>
    tpu.vector_store %arg8[%c0_11, %c0_12, %c0_13], %19 {strides = array<i32>} : memref<1x16x128xbf16, #tpu.memory_space<vmem>>, vector<1x16x128xbf16>,
    return
  }
  func.func @transform_0(%arg0: i32, %arg1: i32, %arg2: i32, %arg3: i32) -> (i32, i32, i32) {
    %c0_i32 = arith.constant 0 : i32
    return %arg0, %arg1, %arg3 : i32, i32, i32
  }
  func.func @transform_1(%arg0: i32, %arg1: i32, %arg2: i32, %arg3: i32) -> (i32, i32, i32) {
    %c0_i32 = arith.constant 0 : i32
    return %arg0, %arg3, %arg2 : i32, i32, i32
  }
  func.func @transform_2(%arg0: i32, %arg1: i32, %arg2: i32, %arg3: i32) -> (i32, i32) {
    %c0_i32 = arith.constant 0 : i32
    %c0_i32_0 = arith.constant 0 : i32
    return %c0_i32, %arg2 : i32, i32
  }
  func.func @transform_3(%arg0: i32, %arg1: i32, %arg2: i32, %arg3: i32) -> (i32, i32) {
    %c0_i32 = arith.constant 0 : i32
    %c0_i32_0 = arith.constant 0 : i32
    return %c0_i32, %arg2 : i32, i32
  }
  func.func @transform_4(%arg0: i32, %arg1: i32, %arg2: i32, %arg3: i32) -> (i32, i32, i32) {
    %c0_i32 = arith.constant 0 : i32
    return %arg0, %arg1, %arg2 : i32, i32, i32
  }
}

</mosaic_0001>

<llo_original>
// kernel: tpu_custom_call.1
$region0: #{tpu_custom_call.1}
  #allocation0 [shape = 'u32[]', space=smem, size = 0x4, offset = 0x4, fixed_abs, tag = 'smem constant byte address 0x4 - core index']
  #allocation1 [shape = 'u32[144,128]{1,0:T(1,128)}', space=vmem, size = 0x12000, scoped, tag = 'internal scratch']
  %s0 = inlined_call_operand.hbm [shape: bf16[1,16,128], index: 0, kind: input, shape index: {}]
  %s1 = inlined_call_operand.hbm [shape: bf16[1,128,128], index: 1, kind: input, shape index: {}]
  %s2 = inlined_call_operand.vmem [shape: f32[1,128], index: 2, kind: input, shape index: {}]
  %s3 = inlined_call_operand.vmem [shape: f32[1,128], index: 3, kind: input, shape index: {}]
  %s4 = inlined_call_operand.hbm [shape: bf16[1,16,128], index: 4, kind: output, shape index: {}]
  %s5 = sld [smem:[#allocation0]]
  $region34: #{tpu_custom_call.1} parent=0
    _
  %s7 = ssub.s32 1, %s5
  %s8 = scalar_select 0, %s7, %s5
  $region1: #{tpu_custom_call.1} parent=0
    #allocation2 [shape = 'u8[4096]{0}', space=vmem, size = 0x1000, scoped, tag = 'input window, operand 0, single buffered']
    #allocation3 [shape = 's32[1]{0}', space=sflag, size = 0x4, scoped, tag = 'scoped memory for tpu_custom_call.1']
    #allocation4 [shape = 's32[1]{0}', space=sflag, size = 0x4, scoped, tag = 'scoped memory for tpu_custom_call.1']
    #allocation5 [shape = 'u8[32768]{0}', space=vmem, size = 0x8000, scoped, tag = 'input window, operand 1, single buffered']
    #allocation6 [shape = 's32[1]{0}', space=sflag, size = 0x4, scoped, tag = 'scoped memory for tpu_custom_call.1']
    #allocation7 [shape = 'u8[4096]{0}', space=vmem, size = 0x1000, scoped, tag = 'output window, operand 0, single buffered']
    %9 = vsyncpa [#allocation3], 0
    %10 = vsyncpa [#allocation6], 0
    %11 = vsyncpa [#allocation4], 0
    // Predicated region
    $region2: #{tpu_custom_call.1} parent=1 // pred_check
      _
    $region3: #{tpu_custom_call.1} parent=1 // pred_check_branch
      %13 = sbr.rel (0) target = $region5
    $region4: #{tpu_custom_call.1} parent=1 // pred_region
      %s15 = ssub.s32 128, 128
      %16 = vsyncadd [#allocation3], %s15
      %s17 = sshll.u32 [#allocation2], 4
      %s18 = int_to_ptr.vmem [resolvable:$true] %s17
      %23 = dma.hbm_to_vmem [thread:$0]  %s0, 128, %s18, [#allocation3], 64, 64, 4
    $region5: #{tpu_custom_call.1} parent=1 // pred_fallthru
      _
    // Predicated region
    $region6: #{tpu_custom_call.1} parent=1 // pred_check
      _
    $region7: #{tpu_custom_call.1} parent=1 // pred_check_branch
      %25 = sbr.rel (0) target = $region9
    $region8: #{tpu_custom_call.1} parent=1 // pred_region
      %s27 = ssub.s32 1024, 1024
      %28 = vsyncadd [#allocation6], %s27
      %s29 = sshll.u32 [#allocation5], 4
      %s30 = int_to_ptr.vmem [resolvable:$true] %s29
      %35 = dma.hbm_to_vmem [thread:$0]  %s1, 1024, %s30, [#allocation6], 64, 64, 4
    $region9: #{tpu_custom_call.1} parent=1 // pred_fallthru
      _
    // Predicated region
    $region10: #{tpu_custom_call.1} parent=1 // pred_check
      _
    $region11: #{tpu_custom_call.1} parent=1 // pred_check_branch
      %37 = sbr.rel (0) target = $region13
    $region12: #{tpu_custom_call.1} parent=1 // pred_region
      _
    $region13: #{tpu_custom_call.1} parent=1 // pred_fallthru
      _
    // Predicated region
    $region14: #{tpu_custom_call.1} parent=1 // pred_check
      _
    $region15: #{tpu_custom_call.1} parent=1 // pred_check_branch
      %39 = sbr.rel (0) target = $region17
    $region16: #{tpu_custom_call.1} parent=1 // pred_region
      _
    $region17: #{tpu_custom_call.1} parent=1 // pred_fallthru
      _
    // Predicated region
    $region18: #{tpu_custom_call.1} parent=1 // pred_check
      _
    $region19: #{tpu_custom_call.1} parent=1 // pred_check_branch
      %41 = sbr.rel (0) target = $region21
    $region20: #{tpu_custom_call.1} parent=1 // pred_region
      %42 = dma.done [#allocation3], 128
    $region21: #{tpu_custom_call.1} parent=1 // pred_fallthru
      _
    // Predicated region
    $region22: #{tpu_custom_call.1} parent=1 // pred_check
      _
    $region23: #{tpu_custom_call.1} parent=1 // pred_check_branch
      %44 = sbr.rel (0) target = $region25
    $region24: #{tpu_custom_call.1} parent=1 // pred_region
      %45 = dma.done [#allocation6], 1024
    $region25: #{tpu_custom_call.1} parent=1 // pred_fallthru
      _
    %v47 = vld [vmem:[#allocation2] sm:$0xf]
    %v48 = vld [vmem:[#allocation2 + $0x4] sm:$0xf]
    %v49 = vld [vmem:[#allocation5] sm:$0xf]
    %v50 = vld [vmem:[#allocation5 + $0x4] sm:$0xf]
    %v51 = vld [vmem:[#allocation5 + $0x8] sm:$0xf]
    %v52 = vld [vmem:[#allocation5 + $0xc] sm:$0xf]
    %v53 = vld [vmem:[#allocation5 + $0x10] sm:$0xf]
    %v54 = vld [vmem:[#allocation5 + $0x14] sm:$0xf]
    %v55 = vld [vmem:[#allocation5 + $0x18] sm:$0xf]
    %v56 = vld [vmem:[#allocation5 + $0x1c] sm:$0xf]
    %v57 = vld [vmem:[#allocation5 + $0x20] sm:$0xf]
    %v58 = vld [vmem:[#allocation5 + $0x24] sm:$0xf]
    %v59 = vld [vmem:[#allocation5 + $0x28] sm:$0xf]
    %v60 = vld [vmem:[#allocation5 + $0x2c] sm:$0xf]
    %v61 = vld [vmem:[#allocation5 + $0x30] sm:$0xf]
    %v62 = vld [vmem:[#allocation5 + $0x34] sm:$0xf]
    %v63 = vld [vmem:[#allocation5 + $0x38] sm:$0xf]
    %v64 = vld [vmem:[#allocation5 + $0x3c] sm:$0xf]
    %v67 = vunpack.c.l.b16 %v47
    %v68 = vunpack.c.l.b16 %v48
    %v69 = vpack.c.b16 %v68, %v67
    %v87 = vunpack.c.l.b16 %v49
    %v88 = vunpack.c.l.b16 %v50
    %v89 = vunpack.c.l.b16 %v51
    %v90 = vunpack.c.l.b16 %v52
    %v91 = vunpack.c.l.b16 %v53
    %v92 = vunpack.c.l.b16 %v54
    %v93 = vunpack.c.l.b16 %v55
    %v94 = vunpack.c.l.b16 %v56
    %v95 = vunpack.c.l.b16 %v57
    %v96 = vunpack.c.l.b16 %v58
    %v97 = vunpack.c.l.b16 %v59
    %v98 = vunpack.c.l.b16 %v60
    %v99 = vunpack.c.l.b16 %v61
    %v100 = vunpack.c.l.b16 %v62
    %v101 = vunpack.c.l.b16 %v63
    %v102 = vunpack.c.l.b16 %v64
    %v103 = vpack.c.b16 %v88, %v87
    %v104 = vpack.c.b16 %v90, %v89
    %v105 = vpack.c.b16 %v92, %v91
    %v106 = vpack.c.b16 %v94, %v93
    %v107 = vpack.c.b16 %v96, %v95
    %v108 = vpack.c.b16 %v98, %v97
    %v109 = vpack.c.b16 %v100, %v99
    %v110 = vpack.c.b16 %v102, %v101
    %119 = vmatprep.subr.bf16.mxu0 0
    %120 = vmatpush1.bf16.msra.mxu0 %v103
    %121 = vmatprep.subr.bf16.mxu0 0
    %122 = vmatpush1.bf16.msra.mxu0 %v104
    %123 = vmatprep.subr.bf16.mxu0 0
    %124 = vmatpush1.bf16.msra.mxu0 %v105
    %125 = vmatprep.subr.bf16.mxu0 0
    %126 = vmatpush1.bf16.msra.mxu0 %v106
    %127 = vmatprep.subr.bf16.mxu0 0
    %128 = vmatpush1.bf16.msra.mxu0 %v107
    %129 = vmatprep.subr.bf16.mxu0 0
    %130 = vmatpush1.bf16.msra.mxu0 %v108
    %131 = vmatprep.subr.bf16.mxu0 0
    %132 = vmatpush1.bf16.msra.mxu0 %v109
    %133 = vmatprep.subr.bf16.mxu0 0
    %134 = vmatpush1.bf16.msra.mxu0 %v110
    %135 = vmatprep.subr.bf16.mxu0 0
    %136 = vmatpush1.bf16.msra.mxu0 0
    %137 = vmatprep.subr.bf16.mxu0 0
    %138 = vmatpush1.bf16.msra.mxu0 0
    %139 = vmatprep.subr.bf16.mxu0 0
    %140 = vmatpush1.bf16.msra.mxu0 0
    %141 = vmatprep.subr.bf16.mxu0 0
    %142 = vmatpush1.bf16.msra.mxu0 0
    %143 = vmatprep.subr.bf16.mxu0 0
    %144 = vmatpush1.bf16.msra.mxu0 0
    %145 = vmatprep.subr.bf16.mxu0 0
    %146 = vmatpush1.bf16.msra.mxu0 0
    %147 = vmatprep.subr.bf16.mxu0 0
    %148 = vmatpush1.bf16.msra.mxu0 0
    %149 = vmatprep.subr.bf16.mxu0 0
    %150 = vmatpush1.bf16.msra.mxu0 0
    %151 = vmatprep.mubr.bf16.mxu0 0
    %152 = vmatmul.mubr.bf16.gmra.mrb[0].mxu0 %v69
    %v153 = vpop.f32.mrb[0].mxu0
    %v154 = vadd.f32 0.0, %v153
    %v155 = vpop.f32.mrb[0].mxu0
    %v156 = vpop.f32.mrb[0].mxu0
    %v157 = vadd.f32 0.0, %v156
    %v158 = vpop.f32.mrb[0].mxu0
    %159 = vdwg.mxu0
    %v160 = vld [vmem:[%s2] sm:$0x1]
    %v161 = vld [vmem:[%s3] sm:$0x1]
    %v163 = vlaneseq
    %v164 = vshrl.u32 %v163, 7
    %v165 = vsub.s32 0, %v164
    %v166 = vrot.slane %v160, %v165
    %v168 = vmul.f32 %v154, %v166
    %v169 = vmul.f32 %v157, %v166
    %v171 = vlaneseq
    %v172 = vshrl.u32 %v171, 7
    %v173 = vsub.s32 0, %v172
    %v174 = vrot.slane %v161, %v173
    %v176 = vadd.f32 %v168, %v174
    %v177 = vadd.f32 %v169, %v174
    %vm178 = vcmp.ge.f32.partialorder %v176, 0.0
    %vm179 = vcmp.ge.f32.partialorder %v177, 0.0
    %v180 = vmul.f32 %v176, 0.2
    %v181 = vmul.f32 %v177, 0.2
    %v182 = vsel %vm178, %v176, %v180
    %v183 = vsel %vm179, %v177, %v181
    %v184 = vpack.c.bf16 %v183, %v182
    %v186 = vunpack.c.l.b16 %v184
    %v187 = vunpack.c.h.b16 %v184
    %v188 = vpack.c.b16 %v186, %v186
    %v189 = vpack.c.b16 %v187, %v187
    %192 = vst [vmem:[#allocation7] sm:$0xf] %v188
    %193 = vst [vmem:[#allocation7 + $0x4] sm:$0xf] %v189
    // Predicated region
    $region26: #{tpu_custom_call.1} parent=1 // pred_check
      _
    $region27: #{tpu_custom_call.1} parent=1 // pred_check_branch
      %195 = sbr.rel (0) target = $region29
    $region28: #{tpu_custom_call.1} parent=1 // pred_region
      %s197 = ssub.s32 128, 128
      %198 = vsyncadd [#allocation4], %s197
      %s199 = sshll.u32 [#allocation7], 4
      %s200 = int_to_ptr.vmem [resolvable:$true] %s199
      %205 = dma.vmem_to_hbm [thread:$0]  %s200, 128, %s4, [#allocation4], 64, 64, 4
    $region29: #{tpu_custom_call.1} parent=1 // pred_fallthru
      _
    // Predicated region
    $region30: #{tpu_custom_call.1} parent=1 // pred_check
      _
    $region31: #{tpu_custom_call.1} parent=1 // pred_check_branch
      %207 = sbr.rel (0) target = $region33
    $region32: #{tpu_custom_call.1} parent=1 // pred_region
      %208 = dma.done [#allocation4], 128
    $region33: #{tpu_custom_call.1} parent=1 // pred_fallthru
      _
    %209 = vsyncpa [#allocation3], 1
    %210 = vsyncpa [#allocation6], 1
    %211 = vsyncpa [#allocation4], 1

</llo_original>
